<compile_context>
chip_gen: v5e
topology: v5e:2x2
jax: 0.10.0
libtpu: 0.0.40
codegen_flags: <defaults>
</compile_context>

<pallas_src>
import jax
import jax.numpy as jnp
import numpy as np
from jax.experimental import pallas as pl
from jax.experimental.pallas import tpu as pltpu


# ---------------------------------------------------------------------------
# Pallas kernel: all three layers fused, everything resident in VMEM
# ---------------------------------------------------------------------------
def _fused3_kernel(x_ref, w1_ref, w2_ref, w3_ref, b1_ref, b2_ref, b3_ref, o_ref):
    # x_ref: (TM, C_in*W) row tile of the activation (lane axis = C_in*W)
    # wN_ref: banded conv+BN weight for layer N, bN_ref: (1, W_out*C) bias
    a = jnp.dot(x_ref[...], w1_ref[...], preferred_element_type=jnp.float32)
    a = jnp.maximum(a + b1_ref[...], 0.0)           # conv1 + BN + ReLU
    a = jnp.dot(a, w2_ref[...], preferred_element_type=jnp.float32)
    a = jnp.maximum(a + b2_ref[...], 0.0)           # conv2 + BN + ReLU
    a = jnp.dot(a, w3_ref[...], preferred_element_type=jnp.float32)
    a = jnp.maximum(a + b3_ref[...], 0.0)           # conv3 + BN + ReLU
    o_ref[...] = a.astype(o_ref.dtype)


# ---------------------------------------------------------------------------
# Host-side weight preprocessing (tiny, constants w.r.t. the activation)
# ---------------------------------------------------------------------------
def _fold_bn(b, bn, eps=1e-5):
    gamma, beta, mean, var = bn
    scale = gamma / jnp.sqrt(var + eps)             # (C_out,)
    bias = (b - mean) * scale + beta                # (C_out,)
    return scale, bias


def _banded_weight(w, scale, w_in, stride, cin_major):
    """Build the Toeplitz/banded matrix so 1-D conv-along-W == one matmul.

    w: PyTorch conv weight (C_out, C_in, 1, k); scale: folded BN scale.
    Input lane ordering: c_in-major (c_in*W + w) if cin_major else w-major
    (w*C_in + c_in).  Output lane ordering is always w_out*C_out + c_out.
    """
    c_out, c_in, _, k = w.shape
    w_out = (w_in - k) // stride + 1
    wf = (w[:, :, 0, :] * scale[:, None, None]).transpose(1, 2, 0)  # (C_in,k,C_out)
    tap = jnp.arange(w_in)[:, None] - jnp.arange(w_out)[None, :] * stride
    valid = ((tap >= 0) & (tap < k)).astype(wf.dtype)               # (W_in,W_out)
    tap_c = jnp.clip(tap, 0, k - 1)
    g = wf[:, tap_c, :] * valid[None, :, :, None]   # (C_in, W_in, W_out, C_out)
    if cin_major:
        banded = g.reshape(c_in * w_in, w_out * c_out)
    else:
        banded = g.transpose(1, 0, 2, 3).reshape(w_in * c_in, w_out * c_out)
    return banded.astype(jnp.float32), w_out


def _choose_row_tile(nh):
    """Sublane-aligned row tile; aim for >=2 grid steps (both v7x TCs)."""
    if nh % 8 != 0 or nh <= 8:
        return nh                                    # full block (== array dim)
    half = min(((nh // 2) // 8) * 8, 512)
    for tm in (half, 8):
        if tm >= 8 and nh % tm == 0:
            return tm
    return nh


# ---------------------------------------------------------------------------
# Forward
# ---------------------------------------------------------------------------
def individual_pos_convs_forward(x, params):
    """Eval-mode forward of Individial_Pos_Convs. x: (N, C_in, H, W) f32."""
    N, C_in, H, W = x.shape
    C = params["w1"].shape[0]

    s1, bb1 = _fold_bn(params["b1"], params["bn1"])
    s2, bb2 = _fold_bn(params["b2"], params["bn2"])
    s3, bb3 = _fold_bn(params["b3"], params["bn3"])

    # conv1: k=2*3*3, stride=2*3 ; conv2: k=3, stride=1 ; conv3: k=kernel_size
    B1, W1 = _banded_weight(params["w1"], s1, W, stride=2 * 3, cin_major=True)
    B2, W2 = _banded_weight(params["w2"], s2, W1, stride=1, cin_major=False)
    B3, W3 = _banded_weight(params["w3"], s3, W2, stride=1, cin_major=False)

    b1t = jnp.tile(bb1, W1).reshape(1, W1 * C).astype(jnp.float32)
    b2t = jnp.tile(bb2, W2).reshape(1, W2 * C).astype(jnp.float32)
    b3t = jnp.tile(bb3, W3).reshape(1, W3 * C).astype(jnp.float32)

    NH = N * H
    # single small layout op: NCHW -> (N*H, C_in*W) row-major rows, lane = c*W+w
    x2d = x.transpose(0, 2, 1, 3).reshape(NH, C_in * W).astype(jnp.float32)

    tm = _choose_row_tile(NH)
    grid = (NH // tm,)

    out2d = pl.pallas_call(
        _fused3_kernel,
        out_shape=jax.ShapeDtypeStruct((NH, W3 * C), jnp.float32),
        grid=grid,
        in_specs=[
            pl.BlockSpec((tm, C_in * W), lambda i: (i, 0)),     # activation tile
            pl.BlockSpec((C_in * W, W1 * C), lambda i: (0, 0)),  # banded conv1 (resident)
            pl.BlockSpec((W1 * C, W2 * C), lambda i: (0, 0)),    # banded conv2 (resident)
            pl.BlockSpec((W2 * C, W3 * C), lambda i: (0, 0)),    # banded conv3 (resident)
            pl.BlockSpec((1, W1 * C), lambda i: (0, 0)),         # fused bias 1
            pl.BlockSpec((1, W2 * C), lambda i: (0, 0)),         # fused bias 2
            pl.BlockSpec((1, W3 * C), lambda i: (0, 0)),         # fused bias 3
        ],
        out_specs=pl.BlockSpec((tm, W3 * C), lambda i: (i, 0)),
        compiler_params=pltpu.CompilerParams(dimension_semantics=("parallel",)),
    )(x2d, B1, B2, B3, b1t, b2t, b3t)

    # (N*H, W3*C) -> (N, C, H, W3) -> unsqueeze(dim=4)
    out = out2d.reshape(N, H, W3, C).transpose(0, 3, 1, 2)
    return out[..., None]


# ---------------------------------------------------------------------------
# Pure-JAX reference (for verification)
# ---------------------------------------------------------------------------
def _ref_layer(x, w, b, bn, stride, eps=1e-5):
    gamma, beta, mean, var = bn
    out = jax.lax.conv_general_dilated(
        x, w, window_strides=(1, stride), padding="VALID",
        dimension_numbers=("NCHW", "OIHW", "NCHW"))
    out = out + b[None, :, None, None]
    out = (out - mean[None, :, None, None]) / jnp.sqrt(var[None, :, None, None] + eps)
    out = out * gamma[None, :, None, None] + beta[None, :, None, None]
    return jnp.maximum(out, 0.0)


def reference_forward(x, p):
    x = _ref_layer(x, p["w1"], p["b1"], p["bn1"], 6)
    x = _ref_layer(x, p["w2"], p["b2"], p["bn2"], 1)
    x = _ref_layer(x, p["w3"], p["b3"], p["bn3"], 1)
    return x[..., None]


# ---------------------------------------------------------------------------
# Deterministic parameter construction
# ---------------------------------------------------------------------------
def make_params(key, input_2Dfeature_channel, feature_channel, kernel_size):
    keys = jax.random.split(key, 12)

    def conv_w(k, shape):
        fan_in = shape[1] * shape[2] * shape[3]
        return (jax.random.normal(k, shape, jnp.float32) / np.sqrt(fan_in)).astype(jnp.float32)

    def bn(k):
        k1, k2, k3, k4 = jax.random.split(k, 4)
        gamma = 1.0 + 0.1 * jax.random.normal(k1, (feature_channel,), jnp.float32)
        beta = 0.1 * jax.random.normal(k2, (feature_channel,), jnp.float32)
        mean = 0.1 * jax.random.normal(k3, (feature_channel,), jnp.float32)
        var = jnp.abs(jax.random.normal(k4, (feature_channel,), jnp.float32)) + 0.5
        return (gamma, beta, mean, var)

    C0, C = input_2Dfeature_channel, feature_channel
    return {
        "w1": conv_w(keys[0], (C, C0, 1, 2 * 3 * 3)),
        "b1": 0.1 * jax.random.normal(keys[1], (C,), jnp.float32),
        "bn1": bn(keys[2]),
        "w2": conv_w(keys[3], (C, C, 1, 3)),
        "b2": 0.1 * jax.random.normal(keys[4], (C,), jnp.float32),
        "bn2": bn(keys[5]),
        "w3": conv_w(keys[6], (C, C, 1, kernel_size)),
        "b3": 0.1 * jax.random.normal(keys[7], (C,), jnp.float32),
        "bn3": bn(keys[8]),
    }


if __name__ == "__main__":
    # Shapes consistent with the module:
    #   input_2Dfeature_channel=1, feature_channel=16, kernel_size=3
    #   x: (N=2, C_in=1, H=8 sensor rows, W=60 time features)
    #   conv1 (k=18, s=6): W 60 -> 8 ; conv2 (k=3): 8 -> 6 ; conv3 (k=3): 6 -> 4
    #   output: (2, 16, 8, 4, 1)
    input_2Dfeature_channel, feature_channel, kernel_size = 1, 16, 3
    N, H, W = 2, 8, 60

    key = jax.random.PRNGKey(0)
    kx, kp = jax.random.split(key)
    x = jax.random.normal(kx, (N, input_2Dfeature_channel, H, W), jnp.float32)
    params = make_params(kp, input_2Dfeature_channel, feature_channel, kernel_size)

    fwd = jax.jit(individual_pos_convs_forward)
    out = jax.block_until_ready(fwd(x, params))
    ref = jax.block_until_ready(reference_forward(x, params))

    assert out.shape == (N, feature_channel, H, 4, 1), out.shape
    np.testing.assert_allclose(np.asarray(out), np.asarray(ref), rtol=1e-4, atol=1e-4)
    print("KERNEL_OK")
</pallas_src>

<mosaic_0001>
module attributes {stable_mosaic.version = 11 : i64} {
  func.func @_fused3_kernel(%arg0: i32, %arg1: memref<8x60xf32, #tpu.memory_space<vmem>>, %arg2: memref<60x128xf32, #tpu.memory_space<vmem>>, %arg3: memref<128x96xf32, #tpu.memory_space<vmem>>, %arg4: memref<96x64xf32, #tpu.memory_space<vmem>>, %arg5: memref<1x128xf32, #tpu.memory_space<vmem>>, %arg6: memref<1x96xf32, #tpu.memory_space<vmem>>, %arg7: memref<1x64xf32, #tpu.memory_space<vmem>>, %arg8: memref<8x64xf32, #tpu.memory_space<vmem>>) attributes {dimension_semantics = [#tpu.dimension_semantics<parallel>], iteration_bounds = array<i64: 2>, scalar_prefetch = 0 : i64, scratch_operands = 0 : i64, tpu.core_type = #tpu.core_type<tc>, window_params = [{transform_indices = @transform_0, window_bounds = array<i64: 8, 60>}, {pipeline_mode = #tpu.pipeline_mode<synchronous>, transform_indices = @transform_1, window_bounds = array<i64: 60, 128>}, {pipeline_mode = #tpu.pipeline_mode<synchronous>, transform_indices = @transform_2, window_bounds = array<i64: 128, 96>}, {pipeline_mode = #tpu.pipeline_mode<synchronous>, transform_indices = @transform_3, window_bounds = array<i64: 96, 64>}, {pipeline_mode = #tpu.pipeline_mode<synchronous>, transform_indices = @transform_4, window_bounds = array<i64: 1, 128>}, {pipeline_mode = #tpu.pipeline_mode<synchronous>, transform_indices = @transform_5, window_bounds = array<i64: 1, 96>}, {pipeline_mode = #tpu.pipeline_mode<synchronous>, transform_indices = @transform_6, window_bounds = array<i64: 1, 64>}, {transform_indices = @transform_7, window_bounds = array<i64: 8, 64>}]} {
    %c0 = arith.constant 0 : index
    %c0_0 = arith.constant 0 : index
    %0 = vector.load %arg1[%c0, %c0_0] : memref<8x60xf32, #tpu.memory_space<vmem>>, vector<8x60xf32>
    %c0_1 = arith.constant 0 : index
    %c0_2 = arith.constant 0 : index
    %1 = vector.load %arg2[%c0_1, %c0_2] : memref<60x128xf32, #tpu.memory_space<vmem>>, vector<60x128xf32>
    %cst = arith.constant dense<0.000000e+00> : vector<8x128xf32>
    %2 = tpu.matmul %0, %1, %cst {dimension_numbers = #tpu.dot_dimension_numbers<[1], [0], [0], [1], [0, 0, 1, 1], [], []>} : vector<8x60xf32>, vector<60x128xf32>, vector<8x128xf32> -> vector<8x128xf32>
    %c0_3 = arith.constant 0 : index
    %c0_4 = arith.constant 0 : index
    %3 = vector.load %arg5[%c0_3, %c0_4] : memref<1x128xf32, #tpu.memory_space<vmem>>, vector<1x128xf32>
    %4 = vector.broadcast %3 : vector<1x128xf32> to vector<8x128xf32>
    %5 = arith.addf %2, %4 : vector<8x128xf32>
    %cst_5 = arith.constant 0.000000e+00 : f32
    %6 = vector.broadcast %cst_5 : f32 to vector<8x128xf32>
    %7 = arith.maximumf %5, %6 : vector<8x128xf32>
    %c0_6 = arith.constant 0 : index
    %c0_7 = arith.constant 0 : index
    %8 = vector.load %arg3[%c0_6, %c0_7] : memref<128x96xf32, #tpu.memory_space<vmem>>, vector<128x96xf32>
    %cst_8 = arith.constant dense<0.000000e+00> : vector<8x96xf32>
    %9 = tpu.matmul %7, %8, %cst_8 {dimension_numbers = #tpu.dot_dimension_numbers<[1], [0], [0], [1], [0, 0, 1, 1], [], []>} : vector<8x128xf32>, vector<128x96xf32>, vector<8x96xf32> -> vector<8x96xf32>
    %c0_9 = arith.constant 0 : index
    %c0_10 = arith.constant 0 : index
    %10 = vector.load %arg6[%c0_9, %c0_10] : memref<1x96xf32, #tpu.memory_space<vmem>>, vector<1x96xf32>
    %11 = vector.broadcast %10 : vector<1x96xf32> to vector<8x96xf32>
    %12 = arith.addf %9, %11 : vector<8x96xf32>
    %cst_11 = arith.constant 0.000000e+00 : f32
    %13 = vector.broadcast %cst_11 : f32 to vector<8x96xf32>
    %14 = arith.maximumf %12, %13 : vector<8x96xf32>
    %c0_12 = arith.constant 0 : index
    %c0_13 = arith.constant 0 : index
    %15 = vector.load %arg4[%c0_12, %c0_13] : memref<96x64xf32, #tpu.memory_space<vmem>>, vector<96x64xf32>
    %cst_14 = arith.constant dense<0.000000e+00> : vector<8x64xf32>
    %16 = tpu.matmul %14, %15, %cst_14 {dimension_numbers = #tpu.dot_dimension_numbers<[1], [0], [0], [1], [0, 0, 1, 1], [], []>} : vector<8x96xf32>, vector<96x64xf32>, vector<8x64xf32> -> vector<8x64xf32>
    %c0_15 = arith.constant 0 : index
    %c0_16 = arith.constant 0 : index
    %17 = vector.load %arg7[%c0_15, %c0_16] : memref<1x64xf32, #tpu.memory_space<vmem>>, vector<1x64xf32>
    %18 = vector.broadcast %17 : vector<1x64xf32> to vector<8x64xf32>
    %19 = arith.addf %16, %18 : vector<8x64xf32>
    %cst_17 = arith.constant 0.000000e+00 : f32
    %20 = vector.broadcast %cst_17 : f32 to vector<8x64xf32>
    %21 = arith.maximumf %19, %20 : vector<8x64xf32>
    %c0_18 = arith.constant 0 : index
    %c0_19 = arith.constant 0 : index
    %22 = vector.load %arg8[%c0_18, %c0_19] : memref<8x64xf32, #tpu.memory_space<vmem>>, vector<8x64xf32>
    tpu.vector_store %arg8[%c0_18, %c0_19], %21 {strides = array<i32>} : memref<8x64xf32, #tpu.memory_space<vmem>>, vector<8x64xf32>,
    return
  }
  func.func @transform_0(%arg0: i32) -> (i32, i32) {
    %c0_i32 = arith.constant 0 : i32
    %c0_i32_0 = arith.constant 0 : i32
    return %arg0, %c0_i32 : i32, i32
  }
  func.func @transform_1(%arg0: i32) -> (i32, i32) {
    %c0_i32 = arith.constant 0 : i32
    %c0_i32_0 = arith.constant 0 : i32
    %c0_i32_1 = arith.constant 0 : i32
    return %c0_i32, %c0_i32_0 : i32, i32
  }
  func.func @transform_2(%arg0: i32) -> (i32, i32) {
    %c0_i32 = arith.constant 0 : i32
    %c0_i32_0 = arith.constant 0 : i32
    %c0_i32_1 = arith.constant 0 : i32
    return %c0_i32, %c0_i32_0 : i32, i32
  }
  func.func @transform_3(%arg0: i32) -> (i32, i32) {
    %c0_i32 = arith.constant 0 : i32
    %c0_i32_0 = arith.constant 0 : i32
    %c0_i32_1 = arith.constant 0 : i32
    return %c0_i32, %c0_i32_0 : i32, i32
  }
  func.func @transform_4(%arg0: i32) -> (i32, i32) {
    %c0_i32 = arith.constant 0 : i32
    %c0_i32_0 = arith.constant 0 : i32
    %c0_i32_1 = arith.constant 0 : i32
    return %c0_i32, %c0_i32_0 : i32, i32
  }
  func.func @transform_5(%arg0: i32) -> (i32, i32) {
    %c0_i32 = arith.constant 0 : i32
    %c0_i32_0 = arith.constant 0 : i32
    %c0_i32_1 = arith.constant 0 : i32
    return %c0_i32, %c0_i32_0 : i32, i32
  }
  func.func @transform_6(%arg0: i32) -> (i32, i32) {
    %c0_i32 = arith.constant 0 : i32
    %c0_i32_0 = arith.constant 0 : i32
    %c0_i32_1 = arith.constant 0 : i32
    return %c0_i32, %c0_i32_0 : i32, i32
  }
  func.func @transform_7(%arg0: i32) -> (i32, i32) {
    %c0_i32 = arith.constant 0 : i32
    %c0_i32_0 = arith.constant 0 : i32
    return %arg0, %c0_i32 : i32, i32
  }
}

</mosaic_0001>

<llo_original>
// kernel: mul.4
$region0: #{mul.4}
  #allocation0 [shape = 's32[1]{0}', space=sflag, size = 0x4, scoped, tag = 'scoped memory for mul.4']
  %s0 = inlined_call_operand.vmem [shape: f32[60,128], index: 0, kind: input, shape index: {}]
  %s1 = inlined_call_operand.vmem [shape: f32[60,128], index: 1, kind: input, shape index: {}]
  %s2 = inlined_call_operand.vmem [shape: f32[60,128], index: 2, kind: output, shape index: {}]
  %v3 = vld [vmem:[%s0] sm:$0xff]
  %v4 = vld [vmem:[%s1] sm:$0xff]
  %5 = xla_tuple %v3, %v4
  %6 = xla_tuple %5
  %v7 = vmul.f32 %v3, %v4
  %8 = xla_tuple %v7
  %9 = vst [vmem:[%s2] sm:$0xff] %v7
  %s10 = scalar_lea.vmem %s0, 8
  %v11 = vld [vmem:[%s10] sm:$0xff]
  %s12 = scalar_lea.vmem %s1, 8
  %v13 = vld [vmem:[%s12] sm:$0xff]
  %14 = xla_tuple %v11, %v13
  %15 = xla_tuple %14
  %v16 = vmul.f32 %v11, %v13
  %17 = xla_tuple %v16
  %s18 = scalar_lea.vmem %s2, 8
  %19 = vst [vmem:[%s18] sm:$0xff] %v16
  %s20 = scalar_lea.vmem %s0, 16
  %v21 = vld [vmem:[%s20] sm:$0xff]
  %s22 = scalar_lea.vmem %s1, 16
  %v23 = vld [vmem:[%s22] sm:$0xff]
  %24 = xla_tuple %v21, %v23
  %25 = xla_tuple %24
  %v26 = vmul.f32 %v21, %v23
  %27 = xla_tuple %v26
  %s28 = scalar_lea.vmem %s2, 16
  %29 = vst [vmem:[%s28] sm:$0xff] %v26
  %s30 = scalar_lea.vmem %s0, 24
  %v31 = vld [vmem:[%s30] sm:$0xff]
  %s32 = scalar_lea.vmem %s1, 24
  %v33 = vld [vmem:[%s32] sm:$0xff]
  %34 = xla_tuple %v31, %v33
  %35 = xla_tuple %34
  %v36 = vmul.f32 %v31, %v33
  %37 = xla_tuple %v36
  %s38 = scalar_lea.vmem %s2, 24
  %39 = vst [vmem:[%s38] sm:$0xff] %v36
  %s40 = scalar_lea.vmem %s0, 32
  %v41 = vld [vmem:[%s40] sm:$0xff]
  %s42 = scalar_lea.vmem %s1, 32
  %v43 = vld [vmem:[%s42] sm:$0xff]
  %44 = xla_tuple %v41, %v43
  %45 = xla_tuple %44
  %v46 = vmul.f32 %v41, %v43
  %47 = xla_tuple %v46
  %s48 = scalar_lea.vmem %s2, 32
  %49 = vst [vmem:[%s48] sm:$0xff] %v46
  %s50 = scalar_lea.vmem %s0, 40
  %v51 = vld [vmem:[%s50] sm:$0xff]
  %s52 = scalar_lea.vmem %s1, 40
  %v53 = vld [vmem:[%s52] sm:$0xff]
  %54 = xla_tuple %v51, %v53
  %55 = xla_tuple %54
  %v56 = vmul.f32 %v51, %v53
  %57 = xla_tuple %v56
  %s58 = scalar_lea.vmem %s2, 40
  %59 = vst [vmem:[%s58] sm:$0xff] %v56
  %s60 = scalar_lea.vmem %s0, 48
  %v61 = vld [vmem:[%s60] sm:$0xff]
  %s62 = scalar_lea.vmem %s1, 48
  %v63 = vld [vmem:[%s62] sm:$0xff]
  %64 = xla_tuple %v61, %v63
  %65 = xla_tuple %64
  %v66 = vmul.f32 %v61, %v63
  %67 = xla_tuple %v66
  %s68 = scalar_lea.vmem %s2, 48
  %69 = vst [vmem:[%s68] sm:$0xff] %v66
  %s70 = scalar_lea.vmem %s0, 56
  %v71 = vld [vmem:[%s70] sm:$0xff]
  %s72 = scalar_lea.vmem %s1, 56
  %v73 = vld [vmem:[%s72] sm:$0xff]
  %74 = xla_tuple %v71, %v73
  %75 = xla_tuple %74
  %v76 = vmul.f32 %v71, %v73
  %77 = xla_tuple %v76
  %s78 = scalar_lea.vmem %s2, 56
  %79 = vst [vmem:[%s78] sm:$0xff] %v76

// kernel: tile.18
$region0: #{tile.18}
  #allocation0 [shape = 's32[1]{0}', space=sflag, size = 0x4, scoped, tag = 'scoped memory for tile.18']
  %s0 = inlined_call_operand.vmem [shape: f32[16], index: 0, kind: input, shape index: {}]
  %s1 = inlined_call_operand.vmem [shape: f32[8,16], index: 1, kind: output, shape index: {}]
  // Predicated region
  $region2: #{tile.18} parent=0 // pred_check
    _
  $region3: #{tile.18} parent=0 // pred_check_branch
    %3 = sbr.rel (0) target = $region5
  $region4: #{tile.18} parent=0 // pred_region
    _
  $region5: #{tile.18} parent=0 // pred_fallthru
    _
  %v4 = vld [vmem:[%s0] ss:$0 sm:$0xff]
  %5 = vst [vmem:[%s1] sm:$0xff] %v4

// kernel: tile.19
$region0: #{tile.19}
  %s0 = inlined_call_operand.vmem [shape: f32[8,16], index: 0, kind: input, shape index: {}]
  %s1 = inlined_call_operand.vmem [shape: f32[1,128], index: 1, kind: output, shape index: {}]
  $region1: #{tile.19} parent=0
    #allocation0 [shape = 'u8[4096]{0}', space=vmem, size = 0x1000, scoped, tag = 'scoped mem for output reshape']
    %v2 = vld [vmem:[%s0] sm:$0x1]
    %vm3 = vcmask 130048
    %4 = vst.msk [vmem:[#allocation0] sm:$0x1] %vm3, %v2
    %s5 = scalar_lea.vmem %s0, 7
    %v6 = vld [vmem:[%s5] sm:$0x1]
    %7 = vrot.lane.b32.xlu0 %v6, 112
    %v8 = vpop.permute.xlu0 %7
    %vm9 = vcmask 1048448
    %10 = vst.msk [vmem:[#allocation0] sm:$0x1] %vm9, %v8
    %s11 = scalar_lea.vmem %s0, 6
    %v12 = vld [vmem:[%s11] sm:$0x1]
    %13 = vrot.lane.b32.xlu0 %v12, 96
    %v14 = vpop.permute.xlu0 %13
    %vm15 = vcmask 917248
    %16 = vst.msk [vmem:[#allocation0] sm:$0x1] %vm15, %v14
    %s17 = scalar_lea.vmem %s0, 5
    %v18 = vld [vmem:[%s17] sm:$0x1]
    %19 = vrot.lane.b32.xlu0 %v18, 80
    %v20 = vpop.permute.xlu0 %19
    %vm21 = vcmask 786048
    %22 = vst.msk [vmem:[#allocation0] sm:$0x1] %vm21, %v20
    %s23 = scalar_lea.vmem %s0, 4
    %v24 = vld [vmem:[%s23] sm:$0x1]
    %25 = vrot.lane.b32.xlu0 %v24, 64
    %v26 = vpop.permute.xlu0 %25
    %vm27 = vcmask 654848
    %28 = vst.msk [vmem:[#allocation0] sm:$0x1] %vm27, %v26
    %s29 = scalar_lea.vmem %s0, 3
    %v30 = vld [vmem:[%s29] sm:$0x1]
    %31 = vrot.lane.b32.xlu0 %v30, 48
    %v32 = vpop.permute.xlu0 %31
    %vm33 = vcmask 523648
    %34 = vst.msk [vmem:[#allocation0] sm:$0x1] %vm33, %v32
    %s35 = scalar_lea.vmem %s0, 2
    %v36 = vld [vmem:[%s35] sm:$0x1]
    %37 = vrot.lane.b32.xlu0 %v36, 32
    %v38 = vpop.permute.xlu0 %37
    %vm39 = vcmask 392448
    %40 = vst.msk [vmem:[#allocation0] sm:$0x1] %vm39, %v38
    %s41 = scalar_lea.vmem %s0, 1
    %v42 = vld [vmem:[%s41] sm:$0x1]
    %43 = vrot.lane.b32.xlu0 %v42, 16
    %v44 = vpop.permute.xlu0 %43
    %vm45 = vcmask 261248
    %46 = vst.msk [vmem:[#allocation0] sm:$0x1] %vm45, %v44
    %s48 = ssub.s32 2, 1
    %v49 = vld [vmem:[#allocation0] sm:%s48]
    %s51 = ssub.s32 2, 1
    %52 = vst [vmem:[%s1] sm:%s51] %v49

// kernel: tile.23
$region0: #{tile.23}
  #allocation0 [shape = 's32[1]{0}', space=sflag, size = 0x4, scoped, tag = 'scoped memory for tile.23']
  %s0 = inlined_call_operand.vmem [shape: f32[16], index: 0, kind: input, shape index: {}]
  %s1 = inlined_call_operand.vmem [shape: f32[6,16], index: 1, kind: output, shape index: {}]
  // Predicated region
  $region2: #{tile.23} parent=0 // pred_check
    _
  $region3: #{tile.23} parent=0 // pred_check_branch
    %3 = sbr.rel (0) target = $region5
  $region4: #{tile.23} parent=0 // pred_region
    _
  $region5: #{tile.23} parent=0 // pred_fallthru
    _
  %v4 = vld [vmem:[%s0] ss:$0 sm:$0xff]
  %5 = vst [vmem:[%s1] sm:$0xff] %v4

// kernel: tile.24
$region0: #{tile.24}
  %s0 = inlined_call_operand.vmem [shape: f32[6,16], index: 0, kind: input, shape index: {}]
  %s1 = inlined_call_operand.vmem [shape: f32[1,96], index: 1, kind: output, shape index: {}]
  $region1: #{tile.24} parent=0
    #allocation0 [shape = 'u8[4096]{0}', space=vmem, size = 0x1000, scoped, tag = 'scoped mem for output reshape']
    %v2 = vld [vmem:[%s0] sm:$0x1]
    %vm3 = vcmask 130048
    %4 = vst.msk [vmem:[#allocation0] sm:$0x1] %vm3, %v2
    %s5 = scalar_lea.vmem %s0, 5
    %v6 = vld [vmem:[%s5] sm:$0x1]
    %7 = vrot.lane.b32.xlu0 %v6, 80
    %v8 = vpop.permute.xlu0 %7
    %vm9 = vcmask 786048
    %10 = vst.msk [vmem:[#allocation0] sm:$0x1] %vm9, %v8
    %s11 = scalar_lea.vmem %s0, 4
    %v12 = vld [vmem:[%s11] sm:$0x1]
    %13 = vrot.lane.b32.xlu0 %v12, 64
    %v14 = vpop.permute.xlu0 %13
    %vm15 = vcmask 654848
    %16 = vst.msk [vmem:[#allocation0] sm:$0x1] %vm15, %v14
    %s17 = scalar_lea.vmem %s0, 3
    %v18 = vld [vmem:[%s17] sm:$0x1]
    %19 = vrot.lane.b32.xlu0 %v18, 48
    %v20 = vpop.permute.xlu0 %19
    %vm21 = vcmask 523648
    %22 = vst.msk [vmem:[#allocation0] sm:$0x1] %vm21, %v20
    %s23 = scalar_lea.vmem %s0, 2
    %v24 = vld [vmem:[%s23] sm:$0x1]
    %25 = vrot.lane.b32.xlu0 %v24, 32
    %v26 = vpop.permute.xlu0 %25
    %vm27 = vcmask 392448
    %28 = vst.msk [vmem:[#allocation0] sm:$0x1] %vm27, %v26
    %s29 = scalar_lea.vmem %s0, 1
    %v30 = vld [vmem:[%s29] sm:$0x1]
    %31 = vrot.lane.b32.xlu0 %v30, 16
    %v32 = vpop.permute.xlu0 %31
    %vm33 = vcmask 261248
    %34 = vst.msk [vmem:[#allocation0] sm:$0x1] %vm33, %v32
    %s36 = ssub.s32 2, 1
    %v37 = vld [vmem:[#allocation0] sm:%s36]
    %s39 = ssub.s32 2, 1
    %40 = vst [vmem:[%s1] sm:%s39] %v37

// kernel: tile.28
$region0: #{tile.28}
  #allocation0 [shape = 's32[1]{0}', space=sflag, size = 0x4, scoped, tag = 'scoped memory for tile.28']
  %s0 = inlined_call_operand.vmem [shape: f32[16], index: 0, kind: input, shape index: {}]
  %s1 = inlined_call_operand.vmem [shape: f32[4,16], index: 1, kind: output, shape index: {}]
  // Predicated region
  $region2: #{tile.28} parent=0 // pred_check
    _
  $region3: #{tile.28} parent=0 // pred_check_branch
    %3 = sbr.rel (0) target = $region5
  $region4: #{tile.28} parent=0 // pred_region
    _
  $region5: #{tile.28} parent=0 // pred_fallthru
    _
  %v4 = vld [vmem:[%s0] ss:$0 sm:$0xff]
  %5 = vst [vmem:[%s1] sm:$0xf] %v4

// kernel: tile.29
$region0: #{tile.29}
  %s0 = inlined_call_operand.vmem [shape: f32[4,16], index: 0, kind: input, shape index: {}]
  %s1 = inlined_call_operand.vmem [shape: f32[1,64], index: 1, kind: output, shape index: {}]
  $region1: #{tile.29} parent=0
    #allocation0 [shape = 'u8[4096]{0}', space=vmem, size = 0x1000, scoped, tag = 'scoped mem for output reshape']
    #allocation1 [shape = 'u8[4096]{0}', space=vmem, size = 0x1000, scoped, tag = 'scoped mem for input reshape']
    %s3 = ssub.s32 16, 1
    %v4 = vld [vmem:[%s0] sm:%s3]
    %5 = vst [vmem:[#allocation1] sm:%s3] %v4
    %v6 = vld [vmem:[#allocation1] sm:$0x1]
    %vm7 = vcmask 130048
    %8 = vst.msk [vmem:[#allocation0] sm:$0x1] %vm7, %v6
    %s9 = scalar_lea.vmem [#allocation1], 3
    %v10 = vld [vmem:[%s9] sm:$0x1]
    %11 = vrot.lane.b32.xlu0 %v10, 48
    %v12 = vpop.permute.xlu0 %11
    %vm13 = vcmask 523648
    %14 = vst.msk [vmem:[#allocation0] sm:$0x1] %vm13, %v12
    %s15 = scalar_lea.vmem [#allocation1], 2
    %v16 = vld [vmem:[%s15] sm:$0x1]
    %17 = vrot.lane.b32.xlu0 %v16, 32
    %v18 = vpop.permute.xlu0 %17
    %vm19 = vcmask 392448
    %20 = vst.msk [vmem:[#allocation0] sm:$0x1] %vm19, %v18
    %s21 = scalar_lea.vmem [#allocation1], 1
    %v22 = vld [vmem:[%s21] sm:$0x1]
    %23 = vrot.lane.b32.xlu0 %v22, 16
    %v24 = vpop.permute.xlu0 %23
    %vm25 = vcmask 261248
    %26 = vst.msk [vmem:[#allocation0] sm:$0x1] %vm25, %v24
    %s28 = ssub.s32 2, 1
    %v29 = vld [vmem:[#allocation0] sm:%s28]
    %s31 = ssub.s32 2, 1
    %32 = vst [vmem:[%s1] sm:%s31] %v29

// kernel: individual_pos_convs_forward.1
$region0: #{individual_pos_convs_forward.1}
  #allocation0 [shape = 'u32[]', space=smem, size = 0x4, offset = 0x4, fixed_abs, tag = 'smem constant byte address 0x4 - core index']
  #allocation1 [shape = 'u32[72,128]{1,0:T(1,128)}', space=vmem, size = 0x9000, scoped, tag = 'internal scratch']
  %s0 = inlined_call_operand.vmem [shape: f32[16,60], index: 0, kind: input, shape index: {}]
  %s1 = inlined_call_operand.vmem [shape: f32[60,128], index: 1, kind: input, shape index: {}]
  %s2 = inlined_call_operand.vmem [shape: f32[128,96], index: 2, kind: input, shape index: {}]
  %s3 = inlined_call_operand.vmem [shape: f32[96,64], index: 3, kind: input, shape index: {}]
  %s4 = inlined_call_operand.vmem [shape: f32[1,128], index: 4, kind: input, shape index: {}]
  %s5 = inlined_call_operand.vmem [shape: f32[1,96], index: 5, kind: input, shape index: {}]
  %s6 = inlined_call_operand.vmem [shape: f32[1,64], index: 6, kind: input, shape index: {}]
  %s7 = inlined_call_operand.vmem [shape: f32[16,64], index: 7, kind: output, shape index: {}]
  %s8 = sld [smem:[#allocation0]]
  $region61: #{individual_pos_convs_forward.1} parent=0
    _
  %s10 = ssub.s32 1, %s8
  %s11 = scalar_select 0, %s10, %s8
  loop: start=0, step=1, limit=4
  $region2: #{individual_pos_convs_forward.1} parent=0 // loop_pre_header
    _
  $region3: #{individual_pos_convs_forward.1} parent=0 // loop_header
    %s13 = sphi 0, %s17
    %p14 = scmp.ge.s32.totalorder %s13, 4
    %s23 = sphi 0, %s25
    %s26 = sphi 0, %s23
    %s27 = sphi 0, %s26
    %s43 = sphi 0, %s27
    %s47 = sphi 0, %s47
    %s49 = sphi 0, %s47
    %s50 = sphi 0, %s49
    %s64 = sphi 0, %s50
    %s68 = sphi 0, %s68
    %s70 = sphi 0, %s68
    %s71 = sphi 0, %s70
    %s85 = sphi 0, %s71
    %s89 = sphi 0, %s89
    %s91 = sphi 0, %s89
    %s92 = sphi 0, %s91
    %s106 = sphi 0, %s92
    %s110 = sphi 0, %s110
    %s112 = sphi 0, %s110
    %s113 = sphi 0, %s112
    %s127 = sphi 0, %s113
    %s131 = sphi 0, %s131
    %s133 = sphi 0, %s131
    %s134 = sphi 0, %s133
    %s148 = sphi 0, %s134
    %s152 = sphi 0, %s152
    %s154 = sphi 0, %s152
    %s155 = sphi 0, %s154
    %s169 = sphi 0, %s155
    %s175 = sphi 0, %s177
    %s178 = sphi 0, %s175
    %s179 = sphi 0, %s178
    %s195 = sphi 0, %s179
  $region4: #{individual_pos_convs_forward.1} parent=0 // loop_header_branch
    %16 = sbr.rel (%p14) target = $region8
  $region5: #{individual_pos_convs_forward.1} parent=0 // loop_body
    %s18 = ssub.s32 %s13, 1
    %s19 = ssub.s32 %s13, 2
    %s20 = sadd.s32 %s13, 1
    %s21 = ssub.s32 %s13, %s20
    %p22 = scmp.eq.s32.totalorder %s21, 0
    %s24 = sadd.s32 %s23, 1
    %s25 = scalar_select %p22, %s23, %s24
    %p28 = pneg %p22
    %p29 = scmp.eq.s32.totalorder %s13, 1
    %p30 = por %p28, %p29
    %p31 = scmp.ne.s32.totalorder %s23, %s26
    %p32 = scmp.eq.s32.totalorder %s13, 0
    %p33 = por %p31, %p32
    %p34 = scmp.ne.s32.totalorder %s23, %s26
    %p35 = scmp.eq.s32.totalorder %s18, 1
    %p36 = por %p34, %p35
    %p37 = scmp.ne.s32.totalorder %s26, %s27
    %p38 = scmp.eq.s32.totalorder %s18, 0
    %p39 = por %p37, %p38
    %p40 = scmp.ne.s32.totalorder %s26, %s27
    %p41 = scmp.eq.s32.totalorder %s19, 1
    %p42 = por %p40, %p41
    %p44 = scmp.ne.s32.totalorder %s27, %s43
    %p45 = scmp.eq.s32.totalorder %s19, 0
    %p46 = por %p44, %p45
    %s48 = sadd.s32 %s47, 1
    %p51 = scmp.eq.s32.totalorder %s13, 1
    %p52 = scmp.ne.s32.totalorder %s47, %s49
    %p53 = scmp.eq.s32.totalorder %s13, 0
    %p54 = por %p52, %p53
    %p55 = scmp.ne.s32.totalorder %s47, %s49
    %p56 = scmp.eq.s32.totalorder %s18, 1
    %p57 = por %p55, %p56
    %p58 = scmp.ne.s32.totalorder %s49, %s50
    %p59 = scmp.eq.s32.totalorder %s18, 0
    %p60 = por %p58, %p59
    %p61 = scmp.ne.s32.totalorder %s49, %s50
    %p62 = scmp.eq.s32.totalorder %s19, 1
    %p63 = por %p61, %p62
    %p65 = scmp.ne.s32.totalorder %s50, %s64
    %p66 = scmp.eq.s32.totalorder %s19, 0
    %p67 = por %p65, %p66
    %s69 = sadd.s32 %s68, 1
    %p72 = scmp.eq.s32.totalorder %s13, 1
    %p73 = scmp.ne.s32.totalorder %s68, %s70
    %p74 = scmp.eq.s32.totalorder %s13, 0
    %p75 = por %p73, %p74
    %p76 = scmp.ne.s32.totalorder %s68, %s70
    %p77 = scmp.eq.s32.totalorder %s18, 1
    %p78 = por %p76, %p77
    %p79 = scmp.ne.s32.totalorder %s70, %s71
    %p80 = scmp.eq.s32.totalorder %s18, 0
    %p81 = por %p79, %p80
    %p82 = scmp.ne.s32.totalorder %s70, %s71
    %p83 = scmp.eq.s32.totalorder %s19, 1
    %p84 = por %p82, %p83
    %p86 = scmp.ne.s32.totalorder %s71, %s85
    %p87 = scmp.eq.s32.totalorder %s19, 0
    %p88 = por %p86, %p87
    %s90 = sadd.s32 %s89, 1
    %p93 = scmp.eq.s32.totalorder %s13, 1
    %p94 = scmp.ne.s32.totalorder %s89, %s91
    %p95 = scmp.eq.s32.totalorder %s13, 0
    %p96 = por %p94, %p95
    %p97 = scmp.ne.s32.totalorder %s89, %s91
    %p98 = scmp.eq.s32.totalorder %s18, 1
    %p99 = por %p97, %p98
    %p100 = scmp.ne.s32.totalorder %s91, %s92
    %p101 = scmp.eq.s32.totalorder %s18, 0
    %p102 = por %p100, %p101
    %p103 = scmp.ne.s32.totalorder %s91, %s92
    %p104 = scmp.eq.s32.totalorder %s19, 1
    %p105 = por %p103, %p104
    %p107 = scmp.ne.s32.totalorder %s92, %s106
    %p108 = scmp.eq.s32.totalorder %s19, 0
    %p109 = por %p107, %p108
    %s111 = sadd.s32 %s110, 1
    %p114 = scmp.eq.s32.totalorder %s13, 1
    %p115 = scmp.ne.s32.totalorder %s110, %s112
    %p116 = scmp.eq.s32.totalorder %s13, 0
    %p117 = por %p115, %p116
    %p118 = scmp.ne.s32.totalorder %s110, %s112
    %p119 = scmp.eq.s32.totalorder %s18, 1
    %p120 = por %p118, %p119
    %p121 = scmp.ne.s32.totalorder %s112, %s113
    %p122 = scmp.eq.s32.totalorder %s18, 0
    %p123 = por %p121, %p122
    %p124 = scmp.ne.s32.totalorder %s112, %s113
    %p125 = scmp.eq.s32.totalorder %s19, 1
    %p126 = por %p124, %p125
    %p128 = scmp.ne.s32.totalorder %s113, %s127
    %p129 = scmp.eq.s32.totalorder %s19, 0
    %p130 = por %p128, %p129
    %s132 = sadd.s32 %s131, 1
    %p135 = scmp.eq.s32.totalorder %s13, 1
    %p136 = scmp.ne.s32.totalorder %s131, %s133
    %p137 = scmp.eq.s32.totalorder %s13, 0
    %p138 = por %p136, %p137
    %p139 = scmp.ne.s32.totalorder %s131, %s133
    %p140 = scmp.eq.s32.totalorder %s18, 1
    %p141 = por %p139, %p140
    %p142 = scmp.ne.s32.totalorder %s133, %s134
    %p143 = scmp.eq.s32.totalorder %s18, 0
    %p144 = por %p142, %p143
    %p145 = scmp.ne.s32.totalorder %s133, %s134
    %p146 = scmp.eq.s32.totalorder %s19, 1
    %p147 = por %p145, %p146
    %p149 = scmp.ne.s32.totalorder %s134, %s148
    %p150 = scmp.eq.s32.totalorder %s19, 0
    %p151 = por %p149, %p150
    %s153 = sadd.s32 %s152, 1
    %p156 = scmp.eq.s32.totalorder %s13, 1
    %p157 = scmp.ne.s32.totalorder %s152, %s154
    %p158 = scmp.eq.s32.totalorder %s13, 0
    %p159 = por %p157, %p158
    %p160 = scmp.ne.s32.totalorder %s152, %s154
    %p161 = scmp.eq.s32.totalorder %s18, 1
    %p162 = por %p160, %p161
    %p163 = scmp.ne.s32.totalorder %s154, %s155
    %p164 = scmp.eq.s32.totalorder %s18, 0
    %p165 = por %p163, %p164
    %p166 = scmp.ne.s32.totalorder %s154, %s155
    %p167 = scmp.eq.s32.totalorder %s19, 1
    %p168 = por %p166, %p167
    %p170 = scmp.ne.s32.totalorder %s155, %s169
    %p171 = scmp.eq.s32.totalorder %s19, 0
    %p172 = por %p170, %p171
    %s173 = ssub.s32 %s13, %s20
    %p174 = scmp.eq.s32.totalorder %s173, 0
    %s176 = sadd.s32 %s175, 1
    %s177 = scalar_select %p174, %s175, %s176
    %p180 = pneg %p174
    %p181 = scmp.eq.s32.totalorder %s13, 1
    %p182 = por %p180, %p181
    %p183 = scmp.ne.s32.totalorder %s175, %s178
    %p184 = scmp.eq.s32.totalorder %s13, 0
    %p185 = por %p183, %p184
    %p186 = scmp.ne.s32.totalorder %s175, %s178
    %p187 = scmp.eq.s32.totalorder %s18, 1
    %p188 = por %p186, %p187
    %p189 = scmp.ne.s32.totalorder %s178, %s179
    %p190 = scmp.eq.s32.totalorder %s18, 0
    %p191 = por %p189, %p190
    %p192 = scmp.ne.s32.totalorder %s178, %s179
    %p193 = scmp.eq.s32.totalorder %s19, 1
    %p194 = por %p192, %p193
    %p196 = scmp.ne.s32.totalorder %s179, %s195
    %p197 = scmp.eq.s32.totalorder %s19, 0
    %p198 = por %p196, %p197
    %p199 = scmp.le.s32.totalorder 1, %s13
    %p200 = scmp.lt.s32.totalorder %s13, 3
    %p201 = pnand %p199, %p200
    %p202 = pneg %p201
    // Predicated region
    $region9: #{individual_pos_convs_forward.1} parent=5 // pred_check
      _
    $region10: #{individual_pos_convs_forward.1} parent=5 // pred_check_branch
      %204 = sbr.rel (%p201) target = $region12
    $region11: #{individual_pos_convs_forward.1} parent=5 // pred_region
      %s205 = ssub.s32 %s13, 1
      // Predicated region
      $region13: #{individual_pos_convs_forward.1} parent=11 // pred_check
        %p206 = pneg %p60
      $region14: #{individual_pos_convs_forward.1} parent=11 // pred_check_branch
        %208 = sbr.rel (%p206) target = $region16
      $region15: #{individual_pos_convs_forward.1} parent=11 // pred_region
        _
      $region16: #{individual_pos_convs_forward.1} parent=11 // pred_fallthru
        _
      // Predicated region
      $region17: #{individual_pos_convs_forward.1} parent=11 // pred_check
        %p209 = pneg %p81
      $region18: #{individual_pos_convs_forward.1} parent=11 // pred_check_branch
        %211 = sbr.rel (%p209) target = $region20
      $region19: #{individual_pos_convs_forward.1} parent=11 // pred_region
        _
      $region20: #{individual_pos_convs_forward.1} parent=11 // pred_fallthru
        _
      // Predicated region
      $region21: #{individual_pos_convs_forward.1} parent=11 // pred_check
        %p212 = pneg %p102
      $region22: #{individual_pos_convs_forward.1} parent=11 // pred_check_branch
        %214 = sbr.rel (%p212) target = $region24
      $region23: #{individual_pos_convs_forward.1} parent=11 // pred_region
        _
      $region24: #{individual_pos_convs_forward.1} parent=11 // pred_fallthru
        _
      // Predicated region
      $region25: #{individual_pos_convs_forward.1} parent=11 // pred_check
        %p215 = pneg %p123
      $region26: #{individual_pos_convs_forward.1} parent=11 // pred_check_branch
        %217 = sbr.rel (%p215) target = $region28
      $region27: #{individual_pos_convs_forward.1} parent=11 // pred_region
        _
      $region28: #{individual_pos_convs_forward.1} parent=11 // pred_fallthru
        _
      // Predicated region
      $region29: #{individual_pos_convs_forward.1} parent=11 // pred_check
        %p218 = pneg %p144
      $region30: #{individual_pos_convs_forward.1} parent=11 // pred_check_branch
        %220 = sbr.rel (%p218) target = $region32
      $region31: #{individual_pos_convs_forward.1} parent=11 // pred_region
        _
      $region32: #{individual_pos_convs_forward.1} parent=11 // pred_fallthru
        _
      // Predicated region
      $region33: #{individual_pos_convs_forward.1} parent=11 // pred_check
        %p221 = pneg %p165
      $region34: #{individual_pos_convs_forward.1} parent=11 // pred_check_branch
        %223 = sbr.rel (%p221) target = $region36
      $region35: #{individual_pos_convs_forward.1} parent=11 // pred_region
        _
      $region36: #{individual_pos_convs_forward.1} parent=11 // pred_fallthru
        _
    $region12: #{individual_pos_convs_forward.1} parent=5 // pred_fallthru
      _
    %p224 = scmp.lt.s32.totalorder %s13, 2
    // Predicated region
    $region37: #{individual_pos_convs_forward.1} parent=5 // pred_check
      %p225 = pneg %p224
    $region38: #{individual_pos_convs_forward.1} parent=5 // pred_check_branch
      %227 = sbr.rel (%p225) target = $region40
    $region39: #{individual_pos_convs_forward.1} parent=5 // pred_region
      // Predicated region
      $region41: #{individual_pos_convs_forward.1} parent=39 // pred_check
        %p228 = pneg %p33
      $region42: #{individual_pos_convs_forward.1} parent=39 // pred_check_branch
        %230 = sbr.rel (%p228) target = $region44
      $region43: #{individual_pos_convs_forward.1} parent=39 // pred_region
        %p231 = scmp.lt.s32.totalorder %s13, 1
        %s232 = scalar_select %p231, %s13, 1
        %s233 = smul.addr %s232, 8
        %s234 = scalar_lea.vmem %s0, %s233
      $region44: #{individual_pos_convs_forward.1} parent=39 // pred_fallthru
        _
    $region40: #{individual_pos_convs_forward.1} parent=5 // pred_fallthru
      _
    %p235 = scmp.le.s32.totalorder 1, %s13
    %p236 = scmp.lt.s32.totalorder %s13, 3
    %p237 = pnand %p235, %p236
    %p238 = pneg %p237
    // Predicated region
    $region45: #{individual_pos_convs_forward.1} parent=5 // pred_check
      _
    $region46: #{individual_pos_convs_forward.1} parent=5 // pred_check_branch
      %240 = sbr.rel (%p237) target = $region48
    $region47: #{individual_pos_convs_forward.1} parent=5 // pred_region
      %s241 = ssub.s32 %s13, 1
      %p242 = scmp.lt.s32.totalorder %s18, 1
      %s243 = scalar_select %p242, %s18, 1
      %s244 = smul.addr %s243, 8
      %s245 = scalar_lea.vmem %s0, %s244
      %p246 = pneg %p39
      %p247 = pneg %p36
      %p248 = pneg %p60
      %p249 = pneg %p57
      %p250 = pneg %p81
      %p251 = pneg %p78
      %p252 = pneg %p102
      %p253 = pneg %p99
      %p254 = pneg %p123
      %p255 = pneg %p120
      %p256 = pneg %p144
      %p257 = pneg %p141
      %p258 = pneg %p165
      %p259 = pneg %p162
      %p260 = pneg %p191
      %p261 = pneg %p188
      %p262 = scmp.lt.s32.totalorder %s18, 1
      %s263 = scalar_select %p262, %s18, 1
      %s264 = smul.addr %s263, 8
      %s265 = scalar_lea.vmem %s7, %s264
      %p266 = scmp.lt.s32.totalorder %s18, 1
      %s267 = scalar_select %p266, %s18, 1
      %s268 = smul.addr %s267, 8
      %s269 = scalar_lea.vmem %s0, %s268
      %p270 = scmp.lt.s32.totalorder %s18, 1
      %s271 = scalar_select %p270, %s18, 1
      %s272 = smul.addr %s271, 8
      %s273 = scalar_lea.vmem %s7, %s272
      %v274 = vld [vmem:[%s269] sm:$0xff]
      %v275 = vld [vmem:[%s1] sm:$0xff]
      %v276 = vld [vmem:[%s1 + $0x8] sm:$0xff]
      %v277 = vld [vmem:[%s1 + $0x10] sm:$0xff]
      %v278 = vld [vmem:[%s1 + $0x18] sm:$0xff]
      %v279 = vld [vmem:[%s1 + $0x20] sm:$0xff]
      %v280 = vld [vmem:[%s1 + $0x28] sm:$0xff]
      %v281 = vld [vmem:[%s1 + $0x30] sm:$0xff]
      %v282 = vld [vmem:[%s1 + $0x38] sm:$0xf]
      %v283 = vld [vmem:[%s4] sm:$0x1]
      %v285 = vperm.slane %v283, 0
      %vm287 = vcmask 490496
      %v289 = vsel %vm287, %v274, 0
      %vm291 = vcmask 1043456
      %v293 = vsel %vm291, %v282, 0
      %295 = vmatpush.msra.mxu0 0.0
      %296 = vmatpush.msra.mxu0 0.0
      %297 = vmatpush.msra.mxu0 0.0
      %298 = vmatpush.msra.mxu0 0.0
      %299 = vmatpush.msra.mxu0 0.0
      %300 = vmatpush.msra.mxu0 0.0
      %301 = vmatpush.msra.mxu0 0.0
      %302 = vmatpush.msra.mxu0 0.0
      %303 = vmatpush.msra.mxu0 %v293
      %304 = vmatpush.msra.mxu0 %v281
      %305 = vmatpush.msra.mxu0 %v280
      %306 = vmatpush.msra.mxu0 %v279
      %307 = vmatpush.msra.mxu0 %v278
      %308 = vmatpush.msra.mxu0 %v277
      %309 = vmatpush.msra.mxu0 %v276
      %310 = vmatpush.msra.mxu0 %v275
      %311 = vmatmul.f32.gmra.mxu0 %v289
      %v312 = vpop.f32.mrf.mxu0
      %v313 = vadd.f32 %v285, %v312
      %314 = vdwg.mxu0
      %v315 = vmax.f32 %v313, 0.0
      %v316 = vld [vmem:[%s2] sm:$0xff]
      %v317 = vld [vmem:[%s2 + $0x8] sm:$0xff]
      %v318 = vld [vmem:[%s2 + $0x10] sm:$0xff]
      %v319 = vld [vmem:[%s2 + $0x18] sm:$0xff]
      %v320 = vld [vmem:[%s2 + $0x20] sm:$0xff]
      %v321 = vld [vmem:[%s2 + $0x28] sm:$0xff]
      %v322 = vld [vmem:[%s2 + $0x30] sm:$0xff]
      %v323 = vld [vmem:[%s2 + $0x38] sm:$0xff]
      %v324 = vld [vmem:[%s2 + $0x40] sm:$0xff]
      %v325 = vld [vmem:[%s2 + $0x48] sm:$0xff]
      %v326 = vld [vmem:[%s2 + $0x50] sm:$0xff]
      %v327 = vld [vmem:[%s2 + $0x58] sm:$0xff]
      %v328 = vld [vmem:[%s2 + $0x60] sm:$0xff]
      %v329 = vld [vmem:[%s2 + $0x68] sm:$0xff]
      %v330 = vld [vmem:[%s2 + $0x70] sm:$0xff]
      %v331 = vld [vmem:[%s2 + $0x78] sm:$0xff]
      %v332 = vld [vmem:[%s5] sm:$0x1]
      %v334 = vperm.slane %v332, 0
      %336 = vmatpush.msra.mxu0 %v331
      %337 = vmatpush.msra.mxu0 %v330
      %338 = vmatpush.msra.mxu0 %v329
      %339 = vmatpush.msra.mxu0 %v328
      %340 = vmatpush.msra.mxu0 %v327
      %341 = vmatpush.msra.mxu0 %v326
      %342 = vmatpush.msra.mxu0 %v325
      %343 = vmatpush.msra.mxu0 %v324
      %344 = vmatpush.msra.mxu0 %v323
      %345 = vmatpush.msra.mxu0 %v322
      %346 = vmatpush.msra.mxu0 %v321
      %347 = vmatpush.msra.mxu0 %v320
      %348 = vmatpush.msra.mxu0 %v319
      %349 = vmatpush.msra.mxu0 %v318
      %350 = vmatpush.msra.mxu0 %v317
      %351 = vmatpush.msra.mxu0 %v316
      %352 = vmatmul.f32.gmra.mxu0 %v315
      %v353 = vpop.f32.mrf.mxu0
      %v354 = vadd.f32 %v334, %v353
      %355 = vdwg.mxu0
      %v356 = vmax.f32 %v354, 0.0
      %v357 = vld [vmem:[%s3] sm:$0xff]
      %v358 = vld [vmem:[%s3 + $0x8] sm:$0xff]
      %v359 = vld [vmem:[%s3 + $0x10] sm:$0xff]
      %v360 = vld [vmem:[%s3 + $0x18] sm:$0xff]
      %v361 = vld [vmem:[%s3 + $0x20] sm:$0xff]
      %v362 = vld [vmem:[%s3 + $0x28] sm:$0xff]
      %v363 = vld [vmem:[%s3 + $0x30] sm:$0xff]
      %v364 = vld [vmem:[%s3 + $0x38] sm:$0xff]
      %v365 = vld [vmem:[%s3 + $0x40] sm:$0xff]
      %v366 = vld [vmem:[%s3 + $0x48] sm:$0xff]
      %v367 = vld [vmem:[%s3 + $0x50] sm:$0xff]
      %v368 = vld [vmem:[%s3 + $0x58] sm:$0xff]
      %v369 = vld [vmem:[%s6] sm:$0x1]
      %v371 = vperm.slane %v369, 0
      %vm373 = vcmask 785408
      %v375 = vsel %vm373, %v356, 0
      %377 = vmatpush.msra.mxu0 0.0
      %378 = vmatpush.msra.mxu0 0.0
      %379 = vmatpush.msra.mxu0 0.0
      %380 = vmatpush.msra.mxu0 0.0
      %381 = vmatpush.msra.mxu0 %v368
      %382 = vmatpush.msra.mxu0 %v367
      %383 = vmatpush.msra.mxu0 %v366
      %384 = vmatpush.msra.mxu0 %v365
      %385 = vmatpush.msra.mxu0 %v364
      %386 = vmatpush.msra.mxu0 %v363
      %387 = vmatpush.msra.mxu0 %v362
      %388 = vmatpush.msra.mxu0 %v361
      %389 = vmatpush.msra.mxu0 %v360
      %390 = vmatpush.msra.mxu0 %v359
      %391 = vmatpush.msra.mxu0 %v358
      %392 = vmatpush.msra.mxu0 %v357
      %393 = vmatmul.f32.gmra.mxu0 %v375
      %v394 = vpop.f32.mrf.mxu0
      %v395 = vadd.f32 %v371, %v394
      %396 = vdwg.mxu0
      %v397 = vmax.f32 %v395, 0.0
      %vm398 = vcmask 523264
      %399 = vst.msk [vmem:[%s273] sm:$0xff] %vm398, %v397
      %p400 = scmp.lt.s32.totalorder %s18, 1
      %s401 = scalar_select %p400, %s18, 1
      %s402 = smul.addr %s401, 8
      %s403 = scalar_lea.vmem %s7, %s402
      // Predicated region
      $region49: #{individual_pos_convs_forward.1} parent=47 // pred_check
        %p404 = pneg %p188
      $region50: #{individual_pos_convs_forward.1} parent=47 // pred_check_branch
        %406 = sbr.rel (%p404) target = $region52
      $region51: #{individual_pos_convs_forward.1} parent=47 // pred_region
        _
      $region52: #{individual_pos_convs_forward.1} parent=47 // pred_fallthru
        _
    $region48: #{individual_pos_convs_forward.1} parent=5 // pred_fallthru
      _
    %p407 = scmp.le.s32.totalorder 2, %s13
    // Predicated region
    $region53: #{individual_pos_convs_forward.1} parent=5 // pred_check
      %p408 = pneg %p407
    $region54: #{individual_pos_convs_forward.1} parent=5 // pred_check_branch
      %410 = sbr.rel (%p408) target = $region56
    $region55: #{individual_pos_convs_forward.1} parent=5 // pred_region
      %s411 = ssub.s32 %s13, 2
      // Predicated region
      $region57: #{individual_pos_convs_forward.1} parent=55 // pred_check
        %p412 = pneg %p194
      $region58: #{individual_pos_convs_forward.1} parent=55 // pred_check_branch
        %414 = sbr.rel (%p412) target = $region60
      $region59: #{individual_pos_convs_forward.1} parent=55 // pred_region
        %p415 = scmp.lt.s32.totalorder %s19, 1
        %s416 = scalar_select %p415, %s19, 1
        %s417 = smul.addr %s416, 8
        %s418 = scalar_lea.vmem %s7, %s417
      $region60: #{individual_pos_convs_forward.1} parent=55 // pred_fallthru
        _
    $region56: #{individual_pos_convs_forward.1} parent=5 // pred_fallthru
      _
  $region6: #{individual_pos_convs_forward.1} parent=0 // loop_footer
    %s17 = sadd.s32 1, %s13
  $region7: #{individual_pos_convs_forward.1} parent=0 // loop_footer_branch
    %12 = sbr.rel target = $region3
  $region8: #{individual_pos_convs_forward.1} parent=0 // loop_exit
    _

</llo_original>
